<compile_context>
chip_gen: v5e
topology: v5e:2x2
jax: 0.10.0
libtpu: 0.0.40
codegen_flags: <defaults>
</compile_context>

<pallas_src>
import jax
import jax.numpy as jnp
from jax.experimental import pallas as pl
from jax.experimental.pallas import tpu as pltpu
from jax.scipy.special import erf


def _round_up(n, m):
    return ((n + m - 1) // m) * m


def _gelu_exact(x):
    """Exact (erf) GELU matching torch.nn.GELU() default.

    erf is evaluated with the Abramowitz & Stegun 7.1.26 rational
    approximation (|abs err| < 1.5e-7).  The divide is replaced by an EUP
    approximate reciprocal (pl.reciprocal(approx=True)) plus one Newton
    refinement step, so no VALU Newton-Raphson divide is emitted (the GELU
    is the VPU-side bottleneck for the C_in=1 layer).
    """
    z = x * 0.7071067811865476           # x / sqrt(2)
    az = jnp.abs(z)
    d = 1.0 + 0.3275911 * az
    r = pl.reciprocal(d, approx=True)    # EUP seed (separate issue slot)
    t = r * (2.0 - d * r)                # one NR step -> ~f32-accurate 1/d
    poly = ((((1.061405429 * t - 1.453152027) * t + 1.421413741) * t
             - 0.284496736) * t + 0.254829592) * t
    erf_az = 1.0 - poly * jnp.exp(-az * az)
    erf_z = jnp.where(z < 0.0, -erf_az, erf_az)
    return 0.5 * x * (1.0 + erf_z)


def conv1d_gelu_kernel(x_ref, w_ref, b_ref, out_ref):
    """One grid step = (batch element b, output-time tile t).  VMEM tiles:

    x_ref:   (K*C_in, TILE_L)  im2col'd input tile: row k*C_in+c, column m
                               holds x[b, c, (t*TILE_L + m)*stride + k]
    w_ref:   (C_out, K*C_in)   folded conv weight (single MXU contraction)
    b_ref:   (C_out, 1)        bias, f32 (zeros when conv_bias=False)
    out_ref: (C_out, TILE_L)   GELU(conv) tile, lane-dense along time
    """
    kc, tile_l = x_ref.shape
    c_out = w_ref.shape[0]

    if kc >= 8:
        # Single folded MXU matmul: contraction depth K*C_in.
        acc = jnp.dot(w_ref[...], x_ref[...],
                      preferred_element_type=jnp.float32)
    else:
        # Degenerate contraction (layer 0: K*C_in = 4): a few broadcasted
        # VPU FMAs beat a padded MXU pass.  Static unroll; broadcasts happen
        # once per grid step (no inner loop around them).
        acc = jnp.zeros((c_out, tile_l), jnp.float32)
        for i in range(kc):
            w_col = w_ref[:, i:i + 1].astype(jnp.float32)   # (C_out, 1)
            x_row = x_ref[i:i + 1, :].astype(jnp.float32)   # (1, TILE_L)
            acc = acc + w_col * x_row

    acc = acc + b_ref[...]                  # per-channel bias, f32
    out_ref[...] = _gelu_exact(acc).astype(out_ref.dtype)


def no_layer_norm_conv_layer(hidden_states, conv_weight, conv_bias, *, stride,
                             tile_l=512, cast_operands_to_bf16=False):
    """Pallas forward of NoLayerNormConvLayer: GELU(Conv1d(x)).

    hidden_states: (B, C_in, L)
    conv_weight:   (C_out, C_in, K)   (torch Conv1d layout)
    conv_bias:     (C_out,) or None   (config.conv_bias)
    Returns (B, C_out, L_out) with L_out = (L - K) // stride + 1.
    """
    B, C_in, L = hidden_states.shape
    C_out, C_in_w, K = conv_weight.shape
    assert C_in_w == C_in, "conv_weight in-channels mismatch"
    assert L >= K, "sequence shorter than kernel"
    L_out = (L - K) // stride + 1

    # ---- time tiling: lane-dense (multiple of 128), VMEM-bounded ----------
    # TILE_L <= 512 keeps 2x(input block) + 2x(output block) + weights well
    # under v7x's 64 MiB physical / 32 MiB scoped VMEM even for C_in = 512.
    TILE_L = max(128, min(tile_l, _round_up(L_out, 128)))
    num_tiles = pl.cdiv(L_out, TILE_L)
    T_total = num_tiles * TILE_L            # padded output length

    # ---- wrapper-side layout plumbing (no compute hoisted) ------------------
    # Per-tap strided slices: x_taps[b, k*C_in + c, m] = x[b, c, m*stride + k].
    # Strided outputs are therefore computed directly (no selection matmul)
    # and all K taps collapse into one contraction.  Zero-pad time so every
    # tap slice is fully in bounds (padded columns are sliced off the output).
    L_need = (T_total - 1) * stride + K
    x = hidden_states
    if L_need > L:
        x = jnp.pad(x, ((0, 0), (0, 0), (0, L_need - L)))
    taps = [x[:, :, k:k + (T_total - 1) * stride + 1:stride] for k in range(K)]
    x_taps = jnp.stack(taps, axis=1).reshape(B, K * C_in, T_total)

    # Weight (C_out, C_in, K) -> (C_out, K*C_in), rows ordered tap-major to
    # match x_taps (one-time transform, no in-kernel transposes).
    w2 = jnp.transpose(conv_weight, (0, 2, 1)).reshape(C_out, K * C_in)

    if cast_operands_to_bf16:
        # Native bf16 MXU path (v5e/v6e/v7x); accumulation stays f32 via
        # preferred_element_type, bias/GELU stay f32.
        x_taps = x_taps.astype(jnp.bfloat16)
        w2 = w2.astype(jnp.bfloat16)

    bias = (jnp.zeros((C_out, 1), jnp.float32) if conv_bias is None
            else conv_bias.reshape(C_out, 1).astype(jnp.float32))

    out_padded = pl.pallas_call(
        conv1d_gelu_kernel,
        out_shape=jax.ShapeDtypeStruct((B, C_out, T_total), hidden_states.dtype),
        grid=(B, num_tiles),
        in_specs=[
            pl.BlockSpec((None, K * C_in, TILE_L), lambda bb, tt: (bb, 0, tt)),
            pl.BlockSpec((C_out, K * C_in), lambda bb, tt: (0, 0)),   # weights
            pl.BlockSpec((C_out, 1), lambda bb, tt: (0, 0)),          # bias
        ],
        out_specs=pl.BlockSpec((None, C_out, TILE_L), lambda bb, tt: (bb, 0, tt)),
        compiler_params=pltpu.CompilerParams(
            dimension_semantics=("parallel", "parallel"),
            vmem_limit_bytes=32 * 1024 * 1024,
        ),
    )(x_taps, w2, bias)

    if T_total == L_out:
        return out_padded
    return out_padded[:, :, :L_out]


def no_layer_norm_conv_layer_reference(hidden_states, conv_weight, conv_bias, *, stride):
    """Pure-JAX (XLA) reference mirroring the PyTorch forward: GELU(Conv1d(x))."""
    B, C_in, L = hidden_states.shape
    C_out, _, K = conv_weight.shape
    L_out = (L - K) // stride + 1
    idx = jnp.arange(L_out)[:, None] * stride + jnp.arange(K)[None, :]   # (L_out, K)
    patches = hidden_states[:, :, idx]                                   # (B, C_in, L_out, K)
    out = jnp.einsum("bclk,ock->bol", patches, conv_weight,
                     precision=jax.lax.Precision.HIGHEST)
    if conv_bias is not None:
        out = out + conv_bias[None, :, None]
    return 0.5 * out * (1.0 + erf(out * 0.7071067811865476))             # exact GELU


if __name__ == "__main__":
    key = jax.random.PRNGKey(0)

    # Configs consistent with the module:
    #   layer0: layer_id = 0 -> in_conv_dim = 1,  conv_dim[0] = 32, kernel 4, stride 2
    #   layer1: layer_id = 1 -> in_conv_dim = 32, conv_dim[1] = 32, kernel 3, stride 2
    #   tiled : layer1 shapes at L = 1027 -> L_out = 513, exercises 2 time tiles.
    cases = [
        dict(name="layer0", B=2, C_in=1,  C_out=32, K=4, S=2, L=64),
        dict(name="layer1", B=2, C_in=32, C_out=32, K=3, S=2, L=33),
        dict(name="tiled",  B=2, C_in=32, C_out=32, K=3, S=2, L=1027),
    ]

    x = w = b = ref = None
    for case in cases:
        key, kx, kw, kb = jax.random.split(key, 4)
        x = jax.random.normal(kx, (case["B"], case["C_in"], case["L"]), dtype=jnp.float32)
        w = jax.random.normal(kw, (case["C_out"], case["C_in"], case["K"]),
                              dtype=jnp.float32) / jnp.sqrt(float(case["C_in"] * case["K"]))
        b = jax.random.normal(kb, (case["C_out"],), dtype=jnp.float32) * 0.02

        l_out = (case["L"] - case["K"]) // case["S"] + 1
        ref = no_layer_norm_conv_layer_reference(x, w, b, stride=case["S"])

        out = no_layer_norm_conv_layer(x, w, b, stride=case["S"])
        out = jax.block_until_ready(out)
        assert out.shape == (case["B"], case["C_out"], l_out), (case["name"], out.shape)
        err = float(jnp.max(jnp.abs(out - ref)))
        assert err < 1e-4, f"{case['name']}: Pallas kernel mismatch (max err {err})"

        if case["name"] == "layer1":
            # conv_bias = False path
            out_nb = jax.block_until_ready(
                no_layer_norm_conv_layer(x, w, None, stride=case["S"]))
            ref_nb = no_layer_norm_conv_layer_reference(x, w, None, stride=case["S"])
            err_nb = float(jnp.max(jnp.abs(out_nb - ref_nb)))
            assert err_nb < 1e-4, f"layer1 (no bias): mismatch (max err {err_nb})"

    # bf16 MXU operand path (perf feedback for v6e/v7x) on the tiled case.
    out_bf16 = jax.block_until_ready(
        no_layer_norm_conv_layer(x, w, b, stride=cases[-1]["S"],
                                 cast_operands_to_bf16=True))
    err_bf16 = float(jnp.max(jnp.abs(out_bf16 - ref)))
    assert err_bf16 < 5e-2, f"bf16 path: mismatch (max err {err_bf16})"

    print("KERNEL_OK")
</pallas_src>

<mosaic_0001>
module attributes {stable_mosaic.version = 11 : i64} {
  func.func @conv1d_gelu_kernel(%arg0: i32, %arg1: i32, %arg2: memref<1x4x128xf32, #tpu.memory_space<vmem>>, %arg3: memref<32x4xf32, #tpu.memory_space<vmem>>, %arg4: memref<32x1xf32, #tpu.memory_space<vmem>>, %arg5: memref<1x32x128xf32, #tpu.memory_space<vmem>>) attributes {dimension_semantics = [#tpu.dimension_semantics<parallel>, #tpu.dimension_semantics<parallel>], iteration_bounds = array<i64: 2, 1>, scalar_prefetch = 0 : i64, scratch_operands = 0 : i64, tpu.core_type = #tpu.core_type<tc>, window_params = [{transform_indices = @transform_0, window_bounds = array<i64: 1, 4, 128>}, {pipeline_mode = #tpu.pipeline_mode<synchronous>, transform_indices = @transform_1, window_bounds = array<i64: 32, 4>}, {pipeline_mode = #tpu.pipeline_mode<synchronous>, transform_indices = @transform_2, window_bounds = array<i64: 32, 1>}, {transform_indices = @transform_3, window_bounds = array<i64: 1, 32, 128>}]} {
    %cst = arith.constant 0.000000e+00 : f32
    %0 = vector.broadcast %cst : f32 to vector<32x128xf32>
    %c0 = arith.constant 0 : index
    %c0_0 = arith.constant 0 : index
    %1 = vector.load %arg3[%c0, %c0_0] : memref<32x4xf32, #tpu.memory_space<vmem>>, vector<32x1xf32>
    %c0_1 = arith.constant 0 : index
    %c0_2 = arith.constant 0 : index
    %c0_3 = arith.constant 0 : index
    %2 = vector.load %arg2[%c0_1, %c0_2, %c0_3] : memref<1x4x128xf32, #tpu.memory_space<vmem>>, vector<1x1x128xf32>
    %3 = vector.shape_cast %2 : vector<1x1x128xf32> to vector<1x128xf32>
    %4 = vector.broadcast %1 : vector<32x1xf32> to vector<32x128xf32>
    %5 = vector.broadcast %3 : vector<1x128xf32> to vector<32x128xf32>
    %6 = arith.mulf %4, %5 : vector<32x128xf32>
    %7 = arith.addf %0, %6 : vector<32x128xf32>
    %c0_4 = arith.constant 0 : index
    %c1 = arith.constant 1 : index
    %8 = vector.load %arg3[%c0_4, %c1] : memref<32x4xf32, #tpu.memory_space<vmem>>, vector<32x1xf32>
    %c0_5 = arith.constant 0 : index
    %c1_6 = arith.constant 1 : index
    %c0_7 = arith.constant 0 : index
    %9 = vector.load %arg2[%c0_5, %c1_6, %c0_7] : memref<1x4x128xf32, #tpu.memory_space<vmem>>, vector<1x1x128xf32>
    %10 = vector.shape_cast %9 : vector<1x1x128xf32> to vector<1x128xf32>
    %11 = vector.broadcast %8 : vector<32x1xf32> to vector<32x128xf32>
    %12 = vector.broadcast %10 : vector<1x128xf32> to vector<32x128xf32>
    %13 = arith.mulf %11, %12 : vector<32x128xf32>
    %14 = arith.addf %7, %13 : vector<32x128xf32>
    %c0_8 = arith.constant 0 : index
    %c2 = arith.constant 2 : index
    %15 = vector.load %arg3[%c0_8, %c2] : memref<32x4xf32, #tpu.memory_space<vmem>>, vector<32x1xf32>
    %c0_9 = arith.constant 0 : index
    %c2_10 = arith.constant 2 : index
    %c0_11 = arith.constant 0 : index
    %16 = vector.load %arg2[%c0_9, %c2_10, %c0_11] : memref<1x4x128xf32, #tpu.memory_space<vmem>>, vector<1x1x128xf32>
    %17 = vector.shape_cast %16 : vector<1x1x128xf32> to vector<1x128xf32>
    %18 = vector.broadcast %15 : vector<32x1xf32> to vector<32x128xf32>
    %19 = vector.broadcast %17 : vector<1x128xf32> to vector<32x128xf32>
    %20 = arith.mulf %18, %19 : vector<32x128xf32>
    %21 = arith.addf %14, %20 : vector<32x128xf32>
    %c0_12 = arith.constant 0 : index
    %c3 = arith.constant 3 : index
    %22 = vector.load %arg3[%c0_12, %c3] : memref<32x4xf32, #tpu.memory_space<vmem>>, vector<32x1xf32>
    %c0_13 = arith.constant 0 : index
    %c3_14 = arith.constant 3 : index
    %c0_15 = arith.constant 0 : index
    %23 = vector.load %arg2[%c0_13, %c3_14, %c0_15] : memref<1x4x128xf32, #tpu.memory_space<vmem>>, vector<1x1x128xf32>
    %24 = vector.shape_cast %23 : vector<1x1x128xf32> to vector<1x128xf32>
    %25 = vector.broadcast %22 : vector<32x1xf32> to vector<32x128xf32>
    %26 = vector.broadcast %24 : vector<1x128xf32> to vector<32x128xf32>
    %27 = arith.mulf %25, %26 : vector<32x128xf32>
    %28 = arith.addf %21, %27 : vector<32x128xf32>
    %c0_16 = arith.constant 0 : index
    %c0_17 = arith.constant 0 : index
    %29 = vector.load %arg4[%c0_16, %c0_17] : memref<32x1xf32, #tpu.memory_space<vmem>>, vector<32x1xf32>
    %30 = vector.broadcast %29 : vector<32x1xf32> to vector<32x128xf32>
    %31 = arith.addf %28, %30 : vector<32x128xf32>
    %cst_18 = arith.constant 0.707106769 : f32
    %32 = vector.broadcast %cst_18 : f32 to vector<32x128xf32>
    %33 = arith.mulf %31, %32 : vector<32x128xf32>
    %34 = math.absf %33 : vector<32x128xf32>
    %cst_19 = arith.constant 0.327591091 : f32
    %35 = vector.broadcast %cst_19 : f32 to vector<32x128xf32>
    %36 = arith.mulf %35, %34 : vector<32x128xf32>
    %cst_20 = arith.constant 1.000000e+00 : f32
    %37 = vector.broadcast %cst_20 : f32 to vector<32x128xf32>
    %38 = arith.addf %37, %36 : vector<32x128xf32>
    %39 = tpu.reciprocal %38 {approx = true} : vector<32x128xf32> -> vector<32x128xf32>
    %40 = arith.mulf %38, %39 : vector<32x128xf32>
    %cst_21 = arith.constant 2.000000e+00 : f32
    %41 = vector.broadcast %cst_21 : f32 to vector<32x128xf32>
    %42 = arith.subf %41, %40 : vector<32x128xf32>
    %43 = arith.mulf %39, %42 : vector<32x128xf32>
    %cst_22 = arith.constant 1.06140542 : f32
    %44 = vector.broadcast %cst_22 : f32 to vector<32x128xf32>
    %45 = arith.mulf %44, %43 : vector<32x128xf32>
    %cst_23 = arith.constant 1.45315206 : f32
    %46 = vector.broadcast %cst_23 : f32 to vector<32x128xf32>
    %47 = arith.subf %45, %46 : vector<32x128xf32>
    %48 = arith.mulf %47, %43 : vector<32x128xf32>
    %cst_24 = arith.constant 1.42141378 : f32
    %49 = vector.broadcast %cst_24 : f32 to vector<32x128xf32>
    %50 = arith.addf %48, %49 : vector<32x128xf32>
    %51 = arith.mulf %50, %43 : vector<32x128xf32>
    %cst_25 = arith.constant 0.284496725 : f32
    %52 = vector.broadcast %cst_25 : f32 to vector<32x128xf32>
    %53 = arith.subf %51, %52 : vector<32x128xf32>
    %54 = arith.mulf %53, %43 : vector<32x128xf32>
    %cst_26 = arith.constant 0.254829586 : f32
    %55 = vector.broadcast %cst_26 : f32 to vector<32x128xf32>
    %56 = arith.addf %54, %55 : vector<32x128xf32>
    %57 = arith.mulf %56, %43 : vector<32x128xf32>
    %cst_27 = arith.constant 0.000000e+00 : f32
    %58 = vector.broadcast %cst_27 : f32 to vector<32x128xf32>
    %59 = arith.subf %58, %34 : vector<32x128xf32>
    %60 = arith.mulf %59, %34 : vector<32x128xf32>
    %61 = math.exp %60 : vector<32x128xf32>
    %62 = arith.mulf %57, %61 : vector<32x128xf32>
    %cst_28 = arith.constant 1.000000e+00 : f32
    %63 = vector.broadcast %cst_28 : f32 to vector<32x128xf32>
    %64 = arith.subf %63, %62 : vector<32x128xf32>
    %cst_29 = arith.constant 0.000000e+00 : f32
    %65 = vector.broadcast %cst_29 : f32 to vector<32x128xf32>
    %66 = arith.cmpf olt, %33, %65 : vector<32x128xf32>
    %cst_30 = arith.constant 0.000000e+00 : f32
    %67 = vector.broadcast %cst_30 : f32 to vector<32x128xf32>
    %68 = arith.subf %67, %64 : vector<32x128xf32>
    %69 = arith.select %66, %68, %64 : vector<32x128xi1>, vector<32x128xf32>
    %cst_31 = arith.constant 5.000000e-01 : f32
    %70 = vector.broadcast %cst_31 : f32 to vector<32x128xf32>
    %71 = arith.mulf %70, %31 : vector<32x128xf32>
    %cst_32 = arith.constant 1.000000e+00 : f32
    %72 = vector.broadcast %cst_32 : f32 to vector<32x128xf32>
    %73 = arith.addf %72, %69 : vector<32x128xf32>
    %74 = arith.mulf %71, %73 : vector<32x128xf32>
    %c0_33 = arith.constant 0 : index
    %c0_34 = arith.constant 0 : index
    %c0_35 = arith.constant 0 : index
    %75 = vector.load %arg5[%c0_33, %c0_34, %c0_35] : memref<1x32x128xf32, #tpu.memory_space<vmem>>, vector<1x32x128xf32>
    %76 = vector.shape_cast %75 : vector<1x32x128xf32> to vector<32x128xf32>
    %77 = vector.shape_cast %74 : vector<32x128xf32> to vector<1x32x128xf32>
    tpu.vector_store %arg5[%c0_33, %c0_34, %c0_35], %77 {strides = array<i32>} : memref<1x32x128xf32, #tpu.memory_space<vmem>>, vector<1x32x128xf32>,
    return
  }
  func.func @transform_0(%arg0: i32, %arg1: i32) -> (i32, i32, i32) {
    %c0_i32 = arith.constant 0 : i32
    %c0_i32_0 = arith.constant 0 : i32
    return %arg0, %c0_i32, %arg1 : i32, i32, i32
  }
  func.func @transform_1(%arg0: i32, %arg1: i32) -> (i32, i32) {
    %c0_i32 = arith.constant 0 : i32
    %c0_i32_0 = arith.constant 0 : i32
    %c0_i32_1 = arith.constant 0 : i32
    return %c0_i32, %c0_i32_0 : i32, i32
  }
  func.func @transform_2(%arg0: i32, %arg1: i32) -> (i32, i32) {
    %c0_i32 = arith.constant 0 : i32
    %c0_i32_0 = arith.constant 0 : i32
    %c0_i32_1 = arith.constant 0 : i32
    return %c0_i32, %c0_i32_0 : i32, i32
  }
  func.func @transform_3(%arg0: i32, %arg1: i32) -> (i32, i32, i32) {
    %c0_i32 = arith.constant 0 : i32
    %c0_i32_0 = arith.constant 0 : i32
    return %arg0, %c0_i32, %arg1 : i32, i32, i32
  }
}

</mosaic_0001>

<llo_original>
// kernel: tpu_custom_call.1
$region0: #{tpu_custom_call.1}
  #allocation0 [shape = 'u32[]', space=smem, size = 0x4, offset = 0x4, fixed_abs, tag = 'smem constant byte address 0x4 - core index']
  #allocation1 [shape = 'u32[72,128]{1,0:T(1,128)}', space=vmem, size = 0x9000, scoped, tag = 'internal scratch']
  %s0 = inlined_call_operand.vmem [shape: f32[2,4,128], index: 0, kind: input, shape index: {}]
  %s1 = inlined_call_operand.vmem [shape: f32[32,4], index: 1, kind: input, shape index: {}]
  %s2 = inlined_call_operand.vmem [shape: f32[32,1], index: 2, kind: input, shape index: {}]
  %s3 = inlined_call_operand.hbm [shape: f32[2,32,128], index: 3, kind: output, shape index: {}]
  %s4 = sld [smem:[#allocation0]]
  $region45: #{tpu_custom_call.1} parent=0
    _
  %s6 = ssub.s32 1, %s4
  %s7 = scalar_select 0, %s6, %s4
  $region1: #{tpu_custom_call.1} parent=0
    #allocation2 [shape = 'u8[32768]{0}', space=vmem, size = 0x8000, scoped, tag = 'output window, operand 0']
    #allocation3 [shape = 's32[2]{0}', space=sflag, size = 0x8, scoped, tag = 'scoped memory for tpu_custom_call.1']
    %8 = vsyncpa [#allocation3], 0
    %s9 = scalar_lea.sflag [#allocation3], 1
    %10 = vsyncpa %s9, 0
    loop: start=0, step=1, limit=4
    $region2: #{tpu_custom_call.1} parent=1 // loop_pre_header
      _
    $region3: #{tpu_custom_call.1} parent=1 // loop_header
      %s12 = sphi 0, %s16
      %p13 = scmp.ge.s32.totalorder %s12, 4
      %s19 = sphi 0, %s31
      %s20 = sphi 0, %s27
      %s21 = sphi 0, %s19
      %s22 = sphi 0, %s20
      %s23 = sphi 0, %s21
      %s24 = sphi 0, %s22
      %s36 = sphi 0, %s38
      %s39 = sphi 0, %s36
      %s40 = sphi 0, %s39
      %s56 = sphi 0, %s40
      %s60 = sphi 0, %s60
      %s62 = sphi 0, %s60
      %s63 = sphi 0, %s62
      %s77 = sphi 0, %s63
      %s81 = sphi 0, %s81
      %s83 = sphi 0, %s81
      %s84 = sphi 0, %s83
      %s98 = sphi 0, %s84
      %s106 = sphi 0, %s108
      %s109 = sphi 0, %s106
      %s110 = sphi 0, %s109
      %s126 = sphi 0, %s110
    $region4: #{tpu_custom_call.1} parent=1 // loop_header_branch
      %15 = sbr.rel (%p13) target = $region8
    $region5: #{tpu_custom_call.1} parent=1 // loop_body
      %s17 = ssub.s32 %s12, 1
      %s18 = ssub.s32 %s12, 2
      %s25 = sadd.s32 1, %s20
      %p26 = scmp.ge.s32.totalorder %s25, 1
      %s27 = scalar_select %p26, 0, %s25
      %s28 = sadd.s32 1, %s19
      %s29 = scalar_select %p26, %s28, %s19
      %p30 = scmp.ge.s32.totalorder %s29, 2
      %s31 = scalar_select %p30, 0, %s29
      %s32 = ssub.s32 %s19, %s31
      %s33 = ssub.s32 %s20, %s27
      %s34 = sor.u32 %s32, %s33
      %p35 = scmp.eq.s32.totalorder %s34, 0
      %s37 = sadd.s32 %s36, 1
      %s38 = scalar_select %p35, %s36, %s37
      %p41 = pneg %p35
      %p42 = scmp.eq.s32.totalorder %s12, 1
      %p43 = por %p41, %p42
      %p44 = scmp.ne.s32.totalorder %s36, %s39
      %p45 = scmp.eq.s32.totalorder %s12, 0
      %p46 = por %p44, %p45
      %p47 = scmp.ne.s32.totalorder %s36, %s39
      %p48 = scmp.eq.s32.totalorder %s17, 1
      %p49 = por %p47, %p48
      %p50 = scmp.ne.s32.totalorder %s39, %s40
      %p51 = scmp.eq.s32.totalorder %s17, 0
      %p52 = por %p50, %p51
      %p53 = scmp.ne.s32.totalorder %s39, %s40
      %p54 = scmp.eq.s32.totalorder %s18, 1
      %p55 = por %p53, %p54
      %p57 = scmp.ne.s32.totalorder %s40, %s56
      %p58 = scmp.eq.s32.totalorder %s18, 0
      %p59 = por %p57, %p58
      %s61 = sadd.s32 %s60, 1
      %p64 = scmp.eq.s32.totalorder %s12, 1
      %p65 = scmp.ne.s32.totalorder %s60, %s62
      %p66 = scmp.eq.s32.totalorder %s12, 0
      %p67 = por %p65, %p66
      %p68 = scmp.ne.s32.totalorder %s60, %s62
      %p69 = scmp.eq.s32.totalorder %s17, 1
      %p70 = por %p68, %p69
      %p71 = scmp.ne.s32.totalorder %s62, %s63
      %p72 = scmp.eq.s32.totalorder %s17, 0
      %p73 = por %p71, %p72
      %p74 = scmp.ne.s32.totalorder %s62, %s63
      %p75 = scmp.eq.s32.totalorder %s18, 1
      %p76 = por %p74, %p75
      %p78 = scmp.ne.s32.totalorder %s63, %s77
      %p79 = scmp.eq.s32.totalorder %s18, 0
      %p80 = por %p78, %p79
      %s82 = sadd.s32 %s81, 1
      %p85 = scmp.eq.s32.totalorder %s12, 1
      %p86 = scmp.ne.s32.totalorder %s81, %s83
      %p87 = scmp.eq.s32.totalorder %s12, 0
      %p88 = por %p86, %p87
      %p89 = scmp.ne.s32.totalorder %s81, %s83
      %p90 = scmp.eq.s32.totalorder %s17, 1
      %p91 = por %p89, %p90
      %p92 = scmp.ne.s32.totalorder %s83, %s84
      %p93 = scmp.eq.s32.totalorder %s17, 0
      %p94 = por %p92, %p93
      %p95 = scmp.ne.s32.totalorder %s83, %s84
      %p96 = scmp.eq.s32.totalorder %s18, 1
      %p97 = por %p95, %p96
      %p99 = scmp.ne.s32.totalorder %s84, %s98
      %p100 = scmp.eq.s32.totalorder %s18, 0
      %p101 = por %p99, %p100
      %s102 = ssub.s32 %s19, %s31
      %s103 = ssub.s32 %s20, %s27
      %s104 = sor.u32 %s102, %s103
      %p105 = scmp.eq.s32.totalorder %s104, 0
      %s107 = sadd.s32 %s106, 1
      %s108 = scalar_select %p105, %s106, %s107
      %p111 = pneg %p105
      %p112 = scmp.eq.s32.totalorder %s12, 1
      %p113 = por %p111, %p112
      %p114 = scmp.ne.s32.totalorder %s106, %s109
      %p115 = scmp.eq.s32.totalorder %s12, 0
      %p116 = por %p114, %p115
      %p117 = scmp.ne.s32.totalorder %s106, %s109
      %p118 = scmp.eq.s32.totalorder %s17, 1
      %p119 = por %p117, %p118
      %p120 = scmp.ne.s32.totalorder %s109, %s110
      %p121 = scmp.eq.s32.totalorder %s17, 0
      %p122 = por %p120, %p121
      %p123 = scmp.ne.s32.totalorder %s109, %s110
      %p124 = scmp.eq.s32.totalorder %s18, 1
      %p125 = por %p123, %p124
      %p127 = scmp.ne.s32.totalorder %s110, %s126
      %p128 = scmp.eq.s32.totalorder %s18, 0
      %p129 = por %p127, %p128
      %p130 = scmp.le.s32.totalorder 1, %s12
      %p131 = scmp.lt.s32.totalorder %s12, 3
      %p132 = pnand %p130, %p131
      %p133 = pneg %p132
      // Predicated region
      $region9: #{tpu_custom_call.1} parent=5 // pred_check
        _
      $region10: #{tpu_custom_call.1} parent=5 // pred_check_branch
        %135 = sbr.rel (%p132) target = $region12
      $region11: #{tpu_custom_call.1} parent=5 // pred_region
        %s136 = ssub.s32 %s12, 1
        // Predicated region
        $region13: #{tpu_custom_call.1} parent=11 // pred_check
          %p137 = pneg %p73
        $region14: #{tpu_custom_call.1} parent=11 // pred_check_branch
          %139 = sbr.rel (%p137) target = $region16
        $region15: #{tpu_custom_call.1} parent=11 // pred_region
          _
        $region16: #{tpu_custom_call.1} parent=11 // pred_fallthru
          _
        // Predicated region
        $region17: #{tpu_custom_call.1} parent=11 // pred_check
          %p140 = pneg %p94
        $region18: #{tpu_custom_call.1} parent=11 // pred_check_branch
          %142 = sbr.rel (%p140) target = $region20
        $region19: #{tpu_custom_call.1} parent=11 // pred_region
          _
        $region20: #{tpu_custom_call.1} parent=11 // pred_fallthru
          _
      $region12: #{tpu_custom_call.1} parent=5 // pred_fallthru
        _
      %p143 = scmp.lt.s32.totalorder %s12, 2
      // Predicated region
      $region21: #{tpu_custom_call.1} parent=5 // pred_check
        %p144 = pneg %p143
      $region22: #{tpu_custom_call.1} parent=5 // pred_check_branch
        %146 = sbr.rel (%p144) target = $region24
      $region23: #{tpu_custom_call.1} parent=5 // pred_region
        // Predicated region
        $region25: #{tpu_custom_call.1} parent=23 // pred_check
          %p147 = pneg %p46
        $region26: #{tpu_custom_call.1} parent=23 // pred_check_branch
          %149 = sbr.rel (%p147) target = $region28
        $region27: #{tpu_custom_call.1} parent=23 // pred_region
          %p150 = scmp.lt.s32.totalorder %s19, 1
          %s151 = scalar_select %p150, %s19, 1
          %p152 = scmp.lt.s32.totalorder %s20, 0
          %s153 = scalar_select %p152, %s20, 0
          %s154 = sadd.s32 %s153, %s151
          %s155 = smul.addr %s154, 4
          %s156 = scalar_lea.vmem %s0, %s155
        $region28: #{tpu_custom_call.1} parent=23 // pred_fallthru
          _
      $region24: #{tpu_custom_call.1} parent=5 // pred_fallthru
        _
      %p157 = scmp.le.s32.totalorder 1, %s12
      %p158 = scmp.lt.s32.totalorder %s12, 3
      %p159 = pnand %p157, %p158
      %p160 = pneg %p159
      // Predicated region
      $region29: #{tpu_custom_call.1} parent=5 // pred_check
        _
      $region30: #{tpu_custom_call.1} parent=5 // pred_check_branch
        %162 = sbr.rel (%p159) target = $region32
      $region31: #{tpu_custom_call.1} parent=5 // pred_region
        %s163 = ssub.s32 %s12, 1
        %p164 = scmp.lt.s32.totalorder %s21, 1
        %s165 = scalar_select %p164, %s21, 1
        %p166 = scmp.lt.s32.totalorder %s22, 0
        %s167 = scalar_select %p166, %s22, 0
        %s168 = sadd.s32 %s167, %s165
        %s169 = smul.addr %s168, 4
        %s170 = scalar_lea.vmem %s0, %s169
        %p171 = pneg %p52
        %p172 = pneg %p49
        %p173 = pneg %p73
        %p174 = pneg %p70
        %p175 = pneg %p94
        %p176 = pneg %p91
        %p177 = pneg %p122
        %p178 = pneg %p119
        %s179 = sand.u32 %s109, 1
        %s180 = scalar_lea.sflag [#allocation3], %s179
        %s181 = sand.u32 %s109, 1
        %s182 = smul.addr %s181, 32
        %s183 = scalar_lea.vmem [#allocation2], %s182
        %p184 = scmp.lt.s32.totalorder %s21, 1
        %s185 = scalar_select %p184, %s21, 1
        %p186 = scmp.lt.s32.totalorder %s22, 0
        %s187 = scalar_select %p186, %s22, 0
        %s188 = sadd.s32 %s187, %s185
        %s189 = smul.addr %s188, 4
        %s190 = scalar_lea.vmem %s0, %s189
        %v191 = vld [vmem:[%s1] sm:$0xff]
        %v192 = vld [vmem:[%s1 + $0x8] sm:$0xff]
        %v193 = vld [vmem:[%s1 + $0x10] sm:$0xff]
        %v194 = vld [vmem:[%s1 + $0x18] sm:$0xff]
        %v195 = vld [vmem:[%s190] sm:$0x1]
        %197 = vset.pattern.permute.xlu0 0
        %198 = vperm.xlu0 %197, %v191
        %v199 = vpop.permute.xlu0 %198
        %202 = vset.pattern.permute.xlu0 0
        %203 = vperm.xlu0 %202, %v192
        %v204 = vpop.permute.xlu0 %203
        %207 = vset.pattern.permute.xlu0 0
        %208 = vperm.xlu0 %207, %v193
        %v209 = vpop.permute.xlu0 %208
        %212 = vset.pattern.permute.xlu0 0
        %213 = vperm.xlu0 %212, %v194
        %v214 = vpop.permute.xlu0 %213
        %v216 = vperm.slane %v195, 0
        %v217 = vmul.f32 %v199, %v216
        %v218 = vmul.f32 %v204, %v216
        %v219 = vmul.f32 %v209, %v216
        %v220 = vmul.f32 %v214, %v216
        %v221 = vadd.f32 %v217, 0.0
        %v222 = vadd.f32 %v218, 0.0
        %v223 = vadd.f32 %v219, 0.0
        %v224 = vadd.f32 %v220, 0.0
        %v225 = vld [vmem:[%s190 + $0x1] sm:$0x1]
        %226 = vset.pattern.permute.xlu0 1
        %227 = vperm.xlu0 %226, %v191
        %v228 = vpop.permute.xlu0 %227
        %230 = vset.pattern.permute.xlu0 1
        %231 = vperm.xlu0 %230, %v192
        %v232 = vpop.permute.xlu0 %231
        %234 = vset.pattern.permute.xlu0 1
        %235 = vperm.xlu0 %234, %v193
        %v236 = vpop.permute.xlu0 %235
        %238 = vset.pattern.permute.xlu0 1
        %239 = vperm.xlu0 %238, %v194
        %v240 = vpop.permute.xlu0 %239
        %v242 = vperm.slane %v225, 0
        %v243 = vmul.f32 %v228, %v242
        %v244 = vmul.f32 %v232, %v242
        %v245 = vmul.f32 %v236, %v242
        %v246 = vmul.f32 %v240, %v242
        %v247 = vadd.f32 %v221, %v243
        %v248 = vadd.f32 %v222, %v244
        %v249 = vadd.f32 %v223, %v245
        %v250 = vadd.f32 %v224, %v246
        %v251 = vld [vmem:[%s190 + $0x2] sm:$0x1]
        %252 = vset.pattern.permute.xlu0 2
        %253 = vperm.xlu0 %252, %v191
        %v254 = vpop.permute.xlu0 %253
        %256 = vset.pattern.permute.xlu0 2
        %257 = vperm.xlu0 %256, %v192
        %v258 = vpop.permute.xlu0 %257
        %260 = vset.pattern.permute.xlu0 2
        %261 = vperm.xlu0 %260, %v193
        %v262 = vpop.permute.xlu0 %261
        %264 = vset.pattern.permute.xlu0 2
        %265 = vperm.xlu0 %264, %v194
        %v266 = vpop.permute.xlu0 %265
        %v268 = vperm.slane %v251, 0
        %v269 = vmul.f32 %v254, %v268
        %v270 = vmul.f32 %v258, %v268
        %v271 = vmul.f32 %v262, %v268
        %v272 = vmul.f32 %v266, %v268
        %v273 = vadd.f32 %v247, %v269
        %v274 = vadd.f32 %v248, %v270
        %v275 = vadd.f32 %v249, %v271
        %v276 = vadd.f32 %v250, %v272
        %v277 = vld [vmem:[%s190 + $0x3] sm:$0x1]
        %278 = vset.pattern.permute.xlu0 3
        %279 = vperm.xlu0 %278, %v191
        %v280 = vpop.permute.xlu0 %279
        %282 = vset.pattern.permute.xlu0 3
        %283 = vperm.xlu0 %282, %v192
        %v284 = vpop.permute.xlu0 %283
        %286 = vset.pattern.permute.xlu0 3
        %287 = vperm.xlu0 %286, %v193
        %v288 = vpop.permute.xlu0 %287
        %290 = vset.pattern.permute.xlu0 3
        %291 = vperm.xlu0 %290, %v194
        %v292 = vpop.permute.xlu0 %291
        %v294 = vperm.slane %v277, 0
        %v295 = vmul.f32 %v280, %v294
        %v296 = vmul.f32 %v284, %v294
        %v297 = vmul.f32 %v288, %v294
        %v298 = vmul.f32 %v292, %v294
        %v299 = vadd.f32 %v273, %v295
        %v300 = vadd.f32 %v274, %v296
        %v301 = vadd.f32 %v275, %v297
        %v302 = vadd.f32 %v276, %v298
        %v303 = vld [vmem:[%s2] sm:$0xff]
        %v304 = vld [vmem:[%s2 + $0x8] sm:$0xff]
        %v305 = vld [vmem:[%s2 + $0x10] sm:$0xff]
        %v306 = vld [vmem:[%s2 + $0x18] sm:$0xff]
        %308 = vset.pattern.permute.xlu0 0
        %309 = vperm.xlu0 %308, %v303
        %v310 = vpop.permute.xlu0 %309
        %313 = vset.pattern.permute.xlu0 0
        %314 = vperm.xlu0 %313, %v304
        %v315 = vpop.permute.xlu0 %314
        %318 = vset.pattern.permute.xlu0 0
        %319 = vperm.xlu0 %318, %v305
        %v320 = vpop.permute.xlu0 %319
        %323 = vset.pattern.permute.xlu0 0
        %324 = vperm.xlu0 %323, %v306
        %v325 = vpop.permute.xlu0 %324
        %v327 = vadd.f32 %v299, %v310
        %v328 = vadd.f32 %v300, %v315
        %v329 = vadd.f32 %v301, %v320
        %v330 = vadd.f32 %v302, %v325
        %v331 = vmul.f32 %v327, 0.70710677
        %v332 = vmul.f32 %v328, 0.70710677
        %v333 = vmul.f32 %v329, 0.70710677
        %v334 = vmul.f32 %v330, 0.70710677
        %v335 = vand.u32 2147483647, %v331
        %v336 = vand.u32 2147483647, %v332
        %v337 = vand.u32 2147483647, %v333
        %v338 = vand.u32 2147483647, %v334
        %v339 = vmul.f32 %v335, 0.3275911
        %v340 = vmul.f32 %v336, 0.3275911
        %v341 = vmul.f32 %v337, 0.3275911
        %v342 = vmul.f32 %v338, 0.3275911
        %v343 = vadd.f32 %v339, 1.0
        %v344 = vadd.f32 %v340, 1.0
        %v345 = vadd.f32 %v341, 1.0
        %v346 = vadd.f32 %v342, 1.0
        %v347 = vrcp.pop %v343
        %v348 = vrcp.pop %v344
        %v349 = vrcp.pop %v345
        %v350 = vrcp.pop %v346
        %v351 = vmul.f32 %v343, %v347
        %v352 = vmul.f32 %v344, %v348
        %v353 = vmul.f32 %v345, %v349
        %v354 = vmul.f32 %v346, %v350
        %v355 = vsub.f32 2.0, %v351
        %v356 = vsub.f32 2.0, %v352
        %v357 = vsub.f32 2.0, %v353
        %v358 = vsub.f32 2.0, %v354
        %v359 = vmul.f32 %v347, %v355
        %v360 = vmul.f32 %v348, %v356
        %v361 = vmul.f32 %v349, %v357
        %v362 = vmul.f32 %v350, %v358
        %v363 = vmul.f32 %v359, 1.0614054
        %v364 = vmul.f32 %v360, 1.0614054
        %v365 = vmul.f32 %v361, 1.0614054
        %v366 = vmul.f32 %v362, 1.0614054
        %v367 = vsub.f32 %v363, 1.4531521
        %v368 = vsub.f32 %v364, 1.4531521
        %v369 = vsub.f32 %v365, 1.4531521
        %v370 = vsub.f32 %v366, 1.4531521
        %v371 = vmul.f32 %v367, %v359
        %v372 = vmul.f32 %v368, %v360
        %v373 = vmul.f32 %v369, %v361
        %v374 = vmul.f32 %v370, %v362
        %v375 = vadd.f32 %v371, 1.4214138
        %v376 = vadd.f32 %v372, 1.4214138
        %v377 = vadd.f32 %v373, 1.4214138
        %v378 = vadd.f32 %v374, 1.4214138
        %v379 = vmul.f32 %v375, %v359
        %v380 = vmul.f32 %v376, %v360
        %v381 = vmul.f32 %v377, %v361
        %v382 = vmul.f32 %v378, %v362
        %v383 = vsub.f32 %v379, 0.28449672
        %v384 = vsub.f32 %v380, 0.28449672
        %v385 = vsub.f32 %v381, 0.28449672
        %v386 = vsub.f32 %v382, 0.28449672
        %v387 = vmul.f32 %v383, %v359
        %v388 = vmul.f32 %v384, %v360
        %v389 = vmul.f32 %v385, %v361
        %v390 = vmul.f32 %v386, %v362
        %v391 = vadd.f32 %v387, 0.2548296
        %v392 = vadd.f32 %v388, 0.2548296
        %v393 = vadd.f32 %v389, 0.2548296
        %v394 = vadd.f32 %v390, 0.2548296
        %v395 = vmul.f32 %v391, %v359
        %v396 = vmul.f32 %v392, %v360
        %v397 = vmul.f32 %v393, %v361
        %v398 = vmul.f32 %v394, %v362
        %v399 = vsub.f32 0.0, %v335
        %v400 = vsub.f32 0.0, %v336
        %v401 = vsub.f32 0.0, %v337
        %v402 = vsub.f32 0.0, %v338
        %v403 = vmul.f32 %v399, %v335
        %v404 = vmul.f32 %v400, %v336
        %v405 = vmul.f32 %v401, %v337
        %v406 = vmul.f32 %v402, %v338
        %v407 = vmul.f32 %v403, 1.442695
        %v408 = vpow.pop %v407
        %v409 = vmul.f32 %v404, 1.442695
        %v410 = vpow.pop %v409
        %v411 = vmul.f32 %v405, 1.442695
        %v412 = vpow.pop %v411
        %v413 = vmul.f32 %v406, 1.442695
        %v414 = vpow.pop %v413
        %v415 = vmul.f32 %v395, %v408
        %v416 = vmul.f32 %v396, %v410
        %v417 = vmul.f32 %v397, %v412
        %v418 = vmul.f32 %v398, %v414
        %v419 = vsub.f32 1.0, %v415
        %v420 = vsub.f32 1.0, %v416
        %v421 = vsub.f32 1.0, %v417
        %v422 = vsub.f32 1.0, %v418
        %vm423 = vcmp.lt.f32.partialorder %v331, 0.0
        %vm424 = vcmp.lt.f32.partialorder %v332, 0.0
        %vm425 = vcmp.lt.f32.partialorder %v333, 0.0
        %vm426 = vcmp.lt.f32.partialorder %v334, 0.0
        %v427 = vsub.f32 0.0, %v419
        %v428 = vsub.f32 0.0, %v420
        %v429 = vsub.f32 0.0, %v421
        %v430 = vsub.f32 0.0, %v422
        %v431 = vsel %vm423, %v427, %v419
        %v432 = vsel %vm424, %v428, %v420
        %v433 = vsel %vm425, %v429, %v421
        %v434 = vsel %vm426, %v430, %v422
        %v435 = vmul.f32 %v327, 0.5
        %v436 = vmul.f32 %v328, 0.5
        %v437 = vmul.f32 %v329, 0.5
        %v438 = vmul.f32 %v330, 0.5
        %v439 = vadd.f32 %v431, 1.0
        %v440 = vadd.f32 %v432, 1.0
        %v441 = vadd.f32 %v433, 1.0
        %v442 = vadd.f32 %v434, 1.0
        %v443 = vmul.f32 %v435, %v439
        %v444 = vmul.f32 %v436, %v440
        %v445 = vmul.f32 %v437, %v441
        %v446 = vmul.f32 %v438, %v442
        %447 = vst [vmem:[%s183] sm:$0xff] %v443
        %448 = vst [vmem:[%s183 + $0x8] sm:$0xff] %v444
        %449 = vst [vmem:[%s183 + $0x10] sm:$0xff] %v445
        %450 = vst [vmem:[%s183 + $0x18] sm:$0xff] %v446
        %s451 = sand.u32 %s109, 1
        %s452 = scalar_lea.sflag [#allocation3], %s451
        %s453 = sand.u32 %s109, 1
        %s454 = smul.addr %s453, 32
        %s455 = scalar_lea.vmem [#allocation2], %s454
        // Predicated region
        $region33: #{tpu_custom_call.1} parent=31 // pred_check
          %p456 = pneg %p119
        $region34: #{tpu_custom_call.1} parent=31 // pred_check_branch
          %458 = sbr.rel (%p456) target = $region36
        $region35: #{tpu_custom_call.1} parent=31 // pred_region
          %460 = vsyncadd %s452, 0
          %s461 = smul.addr %s21, 4
          %s462 = sadd.s32 %s22, %s461
          %s463 = smul.addr %s462, 8
          %s464 = scalar_lea.hbm %s3, %s463
          %s465 = sshll.u32 %s455, 4
          %s466 = int_to_ptr.vmem [resolvable:$true] %s465
          %s467 = sshll.u32 %s464, 4
          %s468 = int_to_ptr.hbm [resolvable:$true] %s467
          %473 = dma.vmem_to_hbm [thread:$0]  %s466, 512, %s468, %s452, 128, 128, 8
        $region36: #{tpu_custom_call.1} parent=31 // pred_fallthru
          _
      $region32: #{tpu_custom_call.1} parent=5 // pred_fallthru
        _
      %p474 = scmp.le.s32.totalorder 2, %s12
      // Predicated region
      $region37: #{tpu_custom_call.1} parent=5 // pred_check
        %p475 = pneg %p474
      $region38: #{tpu_custom_call.1} parent=5 // pred_check_branch
        %477 = sbr.rel (%p475) target = $region40
      $region39: #{tpu_custom_call.1} parent=5 // pred_region
        %s478 = ssub.s32 %s12, 2
        // Predicated region
        $region41: #{tpu_custom_call.1} parent=39 // pred_check
          %p479 = pneg %p125
        $region42: #{tpu_custom_call.1} parent=39 // pred_check_branch
          %481 = sbr.rel (%p479) target = $region44
        $region43: #{tpu_custom_call.1} parent=39 // pred_region
          %s482 = sand.u32 %s110, 1
          %s483 = scalar_lea.sflag [#allocation3], %s482
          %s484 = sand.u32 %s110, 1
          %s485 = smul.addr %s484, 32
          %s486 = scalar_lea.vmem [#allocation2], %s485
          %488 = dma.done %s483, 512
        $region44: #{tpu_custom_call.1} parent=39 // pred_fallthru
          _
      $region40: #{tpu_custom_call.1} parent=5 // pred_fallthru
        _
    $region6: #{tpu_custom_call.1} parent=1 // loop_footer
      %s16 = sadd.s32 1, %s12
    $region7: #{tpu_custom_call.1} parent=1 // loop_footer_branch
      %11 = sbr.rel target = $region3
    $region8: #{tpu_custom_call.1} parent=1 // loop_exit
      _
    %489 = vsyncpa [#allocation3], 1
    %s490 = scalar_lea.sflag [#allocation3], 1
    %491 = vsyncpa %s490, 1

</llo_original>
